<compile_context>
chip_gen: v5e
topology: v5e:2x2
jax: 0.10.0
libtpu: 0.0.40
codegen_flags: <defaults>
</compile_context>

<pallas_src>
import jax
import jax.numpy as jnp
from jax.experimental import pallas as pl
from jax.experimental.pallas import tpu as pltpu

_MiB = 1 << 20


def _round_up(a: int, b: int) -> int:
    return -(-a // b) * b


def _sublane(dtype) -> int:
    nbytes = jnp.dtype(dtype).itemsize
    return {4: 8, 2: 16, 1: 32}.get(nbytes, 8)


def _vmem_budget_bytes() -> int:
    """Generation-aware VMEM budget for tile planning.

    Leaves headroom under v7x's 64 MiB physical VMEM per TensorCore and
    actually uses most of v5e/v6e's 128 MiB instead of clamping at 64 MiB.
    """
    try:
        info = pltpu.get_tpu_info()
        phys = int(getattr(info, "vmem_capacity_bytes", 64 * _MiB))
    except Exception:
        phys = 64 * _MiB  # conservative default (v7x per-core size)
    return min(phys * 3 // 4, 96 * _MiB)


# ----------------------------------------------------------------------------
# Kernels
# ----------------------------------------------------------------------------
def _matmul_kernel(x_ref, w_ref, o_ref):
    # Single K pass: one MXU matmul per output tile, direct store (no f32
    # accumulator zero-fill / add / cast passes).
    o_ref[...] = jnp.dot(
        x_ref[...], w_ref[...], preferred_element_type=jnp.float32
    ).astype(o_ref.dtype)


def _matmul_acc_kernel(x_ref, w_ref, o_ref, acc_ref):
    # K-tiled variant with an f32 VMEM accumulator (only used for very large
    # hidden sizes where a full-K tile does not fit the VMEM budget).
    @pl.when(pl.program_id(2) == 0)
    def _init():
        acc_ref[...] = jnp.zeros_like(acc_ref)

    acc_ref[...] += jnp.dot(
        x_ref[...], w_ref[...], preferred_element_type=jnp.float32
    )

    @pl.when(pl.program_id(2) == pl.num_programs(2) - 1)
    def _finalize():
        o_ref[...] = acc_ref[...].astype(o_ref.dtype)


# ----------------------------------------------------------------------------
# Tile planning
# ----------------------------------------------------------------------------
def _pick_tm(M: int, tm_max: int, sublane: int) -> int:
    """Balanced row tile: avoids a near-empty tail tile, keeps sublane align."""
    if M <= tm_max:
        return M  # single block == full dim (no divisibility requirement)
    n_tiles = -(-M // tm_max)
    tm = _round_up(-(-M // n_tiles), sublane)
    return min(tm, tm_max)


def _plan_tiled(M: int, h128: int, nbytes: int, budget: int, sublane: int):
    """Pick (tm, tn, tk) for the large-hidden path.  tk == h128 => full-K."""
    tn_opts = [t for t in (512, 384, 256, 128) if h128 % t == 0] or [128]
    tm_opts = []
    for tm_max in (512, 256, 128):
        tm = _pick_tm(M, tm_max, sublane)
        if tm not in tm_opts:
            tm_opts.append(tm)

    def best(cands):
        # Prefer big output tiles, then squarer, then wider (lane-dense) N.
        return max(cands, key=lambda c: (c[0] * c[1], min(c[0], c[1]), c[1]))

    # 1) Full-K (no accumulator) if the double-buffered tiles fit.
    fits = [
        (tm, tn)
        for tm in tm_opts
        for tn in tn_opts
        if 2 * (tm * h128 + h128 * tn + tm * tn) * nbytes <= budget
    ]
    if fits:
        tm, tn = best(fits)
        return tm, tn, h128

    # 2) K-tiled with f32 accumulator; prefer the largest tk that fits.
    tk_opts = [t for t in (2048, 1024, 512, 256, 128) if h128 % t == 0] or [128]
    for tk in tk_opts:
        fits = [
            (tm, tn)
            for tm in tm_opts
            for tn in tn_opts
            if 2 * (tm * tk + tk * tn + tm * tn) * nbytes + tm * tn * 4 <= budget
        ]
        if fits:
            tm, tn = best(fits)
            return tm, tn, tk

    # 3) Last resort: minimal MXU-aligned tiles.
    return _pick_tm(M, 128, sublane), 128, 128


# ----------------------------------------------------------------------------
# Public entry point
# ----------------------------------------------------------------------------
def transformation_forward(x, trans, *, tm=512, plan_vmem_bytes=None):
    """x: (..., hidden); trans: (hidden, hidden) -> (..., hidden).

    Matches torch's `input_embd.matmul(self.trans)` (broadcast over leading
    dims).  `plan_vmem_bytes` optionally overrides the VMEM budget used only
    for the tiling decision (testing hook); the compiler VMEM limit stays at
    the generation-safe value.
    """
    hidden = trans.shape[0]
    assert trans.shape == (hidden, hidden)
    assert x.shape[-1] == hidden
    lead = x.shape[:-1]
    x2d = x.reshape(-1, hidden)
    M = x2d.shape[0]

    out_dtype = jnp.result_type(x.dtype, trans.dtype)
    nbytes = max(jnp.dtype(x.dtype).itemsize, jnp.dtype(trans.dtype).itemsize)
    sub = _sublane(out_dtype)

    gen_budget = _vmem_budget_bytes()
    budget = gen_budget if plan_vmem_bytes is None else int(plan_vmem_bytes)
    vmem_limit = int(gen_budget)

    cost = pl.CostEstimate(
        flops=2 * M * hidden * hidden,
        transcendentals=0,
        bytes_accessed=(2 * M * hidden + hidden * hidden) * nbytes,
    )
    cparams = dict(vmem_limit_bytes=vmem_limit)

    # ---------------- Path A: weight fully resident in VMEM ----------------
    tm_res = _pick_tm(M, tm, sub)
    resident_need = (2 * hidden * hidden + 4 * tm_res * hidden) * nbytes
    if resident_need <= budget:
        out2d = pl.pallas_call(
            _matmul_kernel,
            out_shape=jax.ShapeDtypeStruct((M, hidden), out_dtype),
            grid_spec=pltpu.PrefetchScalarGridSpec(
                num_scalar_prefetch=0,
                grid=(pl.cdiv(M, tm_res),),
                in_specs=[
                    pl.BlockSpec((tm_res, hidden), lambda i: (i, 0)),
                    # Constant block index: weight DMA'd once, stays resident.
                    pl.BlockSpec((hidden, hidden), lambda i: (0, 0)),
                ],
                out_specs=pl.BlockSpec((tm_res, hidden), lambda i: (i, 0)),
            ),
            compiler_params=pltpu.CompilerParams(
                dimension_semantics=("parallel",), **cparams
            ),
            cost_estimate=cost,
        )(x2d, trans)
        return out2d.reshape(*lead, hidden)

    # ---------------- Path B: large hidden, tiled weight --------------------
    h128 = _round_up(hidden, 128)
    tm_t, tn, tk = _plan_tiled(M, h128, nbytes, budget, sub)

    # Pad only to the next multiple of 128 (K zero-pad keeps the reduction
    # exact; padded N columns are sliced off).  Most large hidden sizes are
    # already multiples of 128 so this is usually a no-op.
    if h128 != hidden:
        xk = jnp.pad(x2d, ((0, 0), (0, h128 - hidden)))
        wk = jnp.pad(trans, ((0, h128 - hidden), (0, h128 - hidden)))
    else:
        xk, wk = x2d, trans

    if tk == h128:
        # Full-K: single pass per output tile, no accumulator.
        out2d = pl.pallas_call(
            _matmul_kernel,
            out_shape=jax.ShapeDtypeStruct((M, h128), out_dtype),
            grid_spec=pltpu.PrefetchScalarGridSpec(
                num_scalar_prefetch=0,
                grid=(pl.cdiv(M, tm_t), h128 // tn),
                in_specs=[
                    pl.BlockSpec((tm_t, h128), lambda i, j: (i, 0)),
                    pl.BlockSpec((h128, tn), lambda i, j: (0, j)),
                ],
                out_specs=pl.BlockSpec((tm_t, tn), lambda i, j: (i, j)),
            ),
            compiler_params=pltpu.CompilerParams(
                dimension_semantics=("parallel", "parallel"), **cparams
            ),
            cost_estimate=cost,
        )(xk, wk)
    else:
        # K-tiled with f32 accumulator; K innermost / "arbitrary".
        out2d = pl.pallas_call(
            _matmul_acc_kernel,
            out_shape=jax.ShapeDtypeStruct((M, h128), out_dtype),
            grid_spec=pltpu.PrefetchScalarGridSpec(
                num_scalar_prefetch=0,
                grid=(pl.cdiv(M, tm_t), h128 // tn, h128 // tk),
                in_specs=[
                    pl.BlockSpec((tm_t, tk), lambda i, j, k: (i, k)),
                    pl.BlockSpec((tk, tn), lambda i, j, k: (k, j)),
                ],
                out_specs=pl.BlockSpec((tm_t, tn), lambda i, j, k: (i, j)),
                scratch_shapes=[pltpu.VMEM((tm_t, tn), jnp.float32)],
            ),
            compiler_params=pltpu.CompilerParams(
                dimension_semantics=("parallel", "parallel", "arbitrary"),
                **cparams,
            ),
            cost_estimate=cost,
        )(xk, wk)

    if h128 != hidden:
        out2d = out2d[:, :hidden]
    return out2d.reshape(*lead, hidden)


# ----------------------------------------------------------------------------
# Self-test
# ----------------------------------------------------------------------------
if __name__ == "__main__":
    key = jax.random.PRNGKey(0)
    k0, k1, k2, k3, k4, k5 = jax.random.split(key, 6)

    # 1) Module-consistent small shape: identity init (torch.eye), hidden=32.
    batch, seq, hidden = 2, 8, 32
    x = jax.random.normal(k0, (batch, seq, hidden), dtype=jnp.float32)
    trans = jnp.eye(hidden, dtype=jnp.float32)
    out = jax.block_until_ready(transformation_forward(x, trans))
    assert out.shape == (batch, seq, hidden)
    assert jnp.allclose(out, jnp.matmul(x, trans), atol=1e-5, rtol=1e-5)

    # 2) Non-identity weight, hidden not a multiple of 128, M not 8-aligned.
    b2, s2, h2 = 2, 9, 288
    x2 = jax.random.normal(k1, (b2, s2, h2), dtype=jnp.float32)
    t2 = jax.random.normal(k2, (h2, h2), dtype=jnp.float32) * 0.05
    out2 = jax.block_until_ready(transformation_forward(x2, t2))
    assert jnp.allclose(out2, jnp.matmul(x2, t2), atol=1e-4, rtol=1e-4)

    # 3) Multi-tile ragged M (exercises balanced row tiling + tail block).
    b3, s3, h3 = 3, 350, 128
    x3 = jax.random.normal(k3, (b3, s3, h3), dtype=jnp.float32)
    t3 = jax.random.normal(k4, (h3, h3), dtype=jnp.float32) * 0.1
    out3 = jax.block_until_ready(transformation_forward(x3, t3))
    assert jnp.allclose(out3, jnp.matmul(x3, t3), atol=1e-4, rtol=1e-4)

    # 4) Force the large-hidden fallback paths via a tiny planning budget
    #    (full-K tiled, then K-tiled accumulator) to validate them too.
    b4, s4, h4 = 2, 35, 384
    x4 = jax.random.normal(k5, (b4, s4, h4), dtype=jnp.float32)
    t4 = jax.random.normal(k2, (h4, h4), dtype=jnp.float32) * 0.05
    ref4 = jnp.matmul(x4, t4)
    out4a = jax.block_until_ready(
        transformation_forward(x4, t4, plan_vmem_bytes=1 * _MiB)  # full-K tiled
    )
    assert jnp.allclose(out4a, ref4, atol=1e-4, rtol=1e-4)
    out4b = jax.block_until_ready(
        transformation_forward(x4, t4, plan_vmem_bytes=512 * 1024)  # K-tiled acc
    )
    assert jnp.allclose(out4b, ref4, atol=1e-4, rtol=1e-4)

    print("KERNEL_OK")
</pallas_src>

<mosaic_0001>
module attributes {stable_mosaic.version = 11 : i64} {
  func.func @_matmul_kernel(%arg0: i32, %arg1: memref<16x32xf32, #tpu.memory_space<vmem>>, %arg2: memref<32x32xf32, #tpu.memory_space<vmem>>, %arg3: memref<16x32xf32, #tpu.memory_space<vmem>>) attributes {dimension_semantics = [#tpu.dimension_semantics<parallel>], iteration_bounds = array<i64: 1>, scalar_prefetch = 0 : i64, scratch_operands = 0 : i64, tpu.core_type = #tpu.core_type<tc>, window_params = [{transform_indices = @transform_0, window_bounds = array<i64: 16, 32>}, {pipeline_mode = #tpu.pipeline_mode<synchronous>, transform_indices = @transform_1, window_bounds = array<i64: 32, 32>}, {transform_indices = @transform_2, window_bounds = array<i64: 16, 32>}]} {
    %c0 = arith.constant 0 : index
    %c0_0 = arith.constant 0 : index
    %0 = vector.load %arg1[%c0, %c0_0] : memref<16x32xf32, #tpu.memory_space<vmem>>, vector<16x32xf32>
    %c0_1 = arith.constant 0 : index
    %c0_2 = arith.constant 0 : index
    %1 = vector.load %arg2[%c0_1, %c0_2] : memref<32x32xf32, #tpu.memory_space<vmem>>, vector<32x32xf32>
    %cst = arith.constant dense<0.000000e+00> : vector<16x32xf32>
    %2 = tpu.matmul %0, %1, %cst {dimension_numbers = #tpu.dot_dimension_numbers<[1], [0], [0], [1], [0, 0, 1, 1], [], []>} : vector<16x32xf32>, vector<32x32xf32>, vector<16x32xf32> -> vector<16x32xf32>
    %c0_3 = arith.constant 0 : index
    %c0_4 = arith.constant 0 : index
    %3 = vector.load %arg3[%c0_3, %c0_4] : memref<16x32xf32, #tpu.memory_space<vmem>>, vector<16x32xf32>
    tpu.vector_store %arg3[%c0_3, %c0_4], %2 {strides = array<i32>} : memref<16x32xf32, #tpu.memory_space<vmem>>, vector<16x32xf32>,
    return
  }
  func.func @transform_0(%arg0: i32) -> (i32, i32) {
    %c0_i32 = arith.constant 0 : i32
    %c0_i32_0 = arith.constant 0 : i32
    return %arg0, %c0_i32 : i32, i32
  }
  func.func @transform_1(%arg0: i32) -> (i32, i32) {
    %c0_i32 = arith.constant 0 : i32
    %c0_i32_0 = arith.constant 0 : i32
    %c0_i32_1 = arith.constant 0 : i32
    return %c0_i32, %c0_i32_0 : i32, i32
  }
  func.func @transform_2(%arg0: i32) -> (i32, i32) {
    %c0_i32 = arith.constant 0 : i32
    %c0_i32_0 = arith.constant 0 : i32
    return %arg0, %c0_i32 : i32, i32
  }
}

</mosaic_0001>

<llo_original>
// kernel: tpu_custom_call.1
$region0: #{tpu_custom_call.1}
  #allocation0 [shape = 'u32[]', space=smem, size = 0x4, offset = 0x4, fixed_abs, tag = 'smem constant byte address 0x4 - core index']
  #allocation1 [shape = 'u32[72,128]{1,0:T(1,128)}', space=vmem, size = 0x9000, scoped, tag = 'internal scratch']
  %s0 = inlined_call_operand.hbm [shape: f32[16,32], index: 0, kind: input, shape index: {}]
  %s1 = inlined_call_operand.hbm [shape: f32[32,32], index: 1, kind: input, shape index: {}]
  %s2 = inlined_call_operand.hbm [shape: f32[16,32], index: 2, kind: output, shape index: {}]
  %s3 = sld [smem:[#allocation0]]
  $region26: #{tpu_custom_call.1} parent=0
    _
  %s5 = ssub.s32 1, %s3
  %s6 = scalar_select 0, %s5, %s3
  $region1: #{tpu_custom_call.1} parent=0
    #allocation2 [shape = 'u8[8192]{0}', space=vmem, size = 0x2000, scoped, tag = 'input window, operand 0, single buffered']
    #allocation3 [shape = 's32[1]{0}', space=sflag, size = 0x4, scoped, tag = 'scoped memory for tpu_custom_call.1']
    #allocation4 [shape = 's32[1]{0}', space=sflag, size = 0x4, scoped, tag = 'scoped memory for tpu_custom_call.1']
    #allocation5 [shape = 'u8[16384]{0}', space=vmem, size = 0x4000, scoped, tag = 'input window, operand 1, single buffered']
    #allocation6 [shape = 's32[1]{0}', space=sflag, size = 0x4, scoped, tag = 'scoped memory for tpu_custom_call.1']
    #allocation7 [shape = 'u8[8192]{0}', space=vmem, size = 0x2000, scoped, tag = 'output window, operand 0, single buffered']
    %7 = vsyncpa [#allocation3], 0
    %8 = vsyncpa [#allocation6], 0
    %9 = vsyncpa [#allocation4], 0
    // Predicated region
    $region2: #{tpu_custom_call.1} parent=1 // pred_check
      _
    $region3: #{tpu_custom_call.1} parent=1 // pred_check_branch
      %11 = sbr.rel (0) target = $region5
    $region4: #{tpu_custom_call.1} parent=1 // pred_region
      %13 = vsyncadd [#allocation3], 0
      %s14 = sshll.u32 %s0, 4
      %s15 = int_to_ptr.hbm [resolvable:$true] %s14
      %s16 = sshll.u32 [#allocation2], 4
      %s17 = int_to_ptr.vmem [resolvable:$true] %s16
      %22 = dma.hbm_to_vmem [thread:$0]  %s15, 256, %s17, [#allocation3], 128, 128, 8
    $region5: #{tpu_custom_call.1} parent=1 // pred_fallthru
      _
    // Predicated region
    $region6: #{tpu_custom_call.1} parent=1 // pred_check
      _
    $region7: #{tpu_custom_call.1} parent=1 // pred_check_branch
      %24 = sbr.rel (0) target = $region9
    $region8: #{tpu_custom_call.1} parent=1 // pred_region
      %26 = vsyncadd [#allocation6], 0
      %s27 = sshll.u32 %s1, 4
      %s28 = int_to_ptr.hbm [resolvable:$true] %s27
      %s29 = sshll.u32 [#allocation5], 4
      %s30 = int_to_ptr.vmem [resolvable:$true] %s29
      %35 = dma.hbm_to_vmem [thread:$0]  %s28, 512, %s30, [#allocation6], 128, 128, 8
    $region9: #{tpu_custom_call.1} parent=1 // pred_fallthru
      _
    // Predicated region
    $region10: #{tpu_custom_call.1} parent=1 // pred_check
      _
    $region11: #{tpu_custom_call.1} parent=1 // pred_check_branch
      %37 = sbr.rel (0) target = $region13
    $region12: #{tpu_custom_call.1} parent=1 // pred_region
      %39 = dma.done [#allocation3], 256
    $region13: #{tpu_custom_call.1} parent=1 // pred_fallthru
      _
    // Predicated region
    $region14: #{tpu_custom_call.1} parent=1 // pred_check
      _
    $region15: #{tpu_custom_call.1} parent=1 // pred_check_branch
      %41 = sbr.rel (0) target = $region17
    $region16: #{tpu_custom_call.1} parent=1 // pred_region
      %43 = dma.done [#allocation6], 512
    $region17: #{tpu_custom_call.1} parent=1 // pred_fallthru
      _
    %v44 = vld [vmem:[#allocation2] sm:$0xff]
    %v45 = vld [vmem:[#allocation2 + $0x8] sm:$0xff]
    %v46 = vld [vmem:[#allocation5] sm:$0xff]
    %v47 = vld [vmem:[#allocation5 + $0x8] sm:$0xff]
    %v48 = vld [vmem:[#allocation5 + $0x10] sm:$0xff]
    %v49 = vld [vmem:[#allocation5 + $0x18] sm:$0xff]
    %vm50 = vcmask 261120
    %v52 = vsel %vm50, %v44, 0
    %v55 = vsel %vm50, %v45, 0
    %57 = vmatpush.msra.mxu0 0.0
    %58 = vmatpush.msra.mxu0 0.0
    %59 = vmatpush.msra.mxu0 0.0
    %60 = vmatpush.msra.mxu0 0.0
    %61 = vmatpush.msra.mxu0 0.0
    %62 = vmatpush.msra.mxu0 0.0
    %63 = vmatpush.msra.mxu0 0.0
    %64 = vmatpush.msra.mxu0 0.0
    %65 = vmatpush.msra.mxu0 0.0
    %66 = vmatpush.msra.mxu0 0.0
    %67 = vmatpush.msra.mxu0 0.0
    %68 = vmatpush.msra.mxu0 0.0
    %69 = vmatpush.msra.mxu0 %v49
    %70 = vmatpush.msra.mxu0 %v48
    %71 = vmatpush.msra.mxu0 %v47
    %72 = vmatpush.msra.mxu0 %v46
    %73 = vmatmul.f32.gmra.mxu0 %v52
    %v74 = vpop.f32.mrf.mxu0
    %v75 = vadd.f32 0.0, %v74
    %76 = vmatmul.f32.gmra.mxu0 %v55
    %v77 = vpop.f32.mrf.mxu0
    %v78 = vadd.f32 0.0, %v77
    %79 = vdwg.mxu0
    %80 = vst.msk [vmem:[#allocation7] sm:$0xff] %vm50, %v75
    %81 = vst.msk [vmem:[#allocation7 + $0x8] sm:$0xff] %vm50, %v78
    // Predicated region
    $region18: #{tpu_custom_call.1} parent=1 // pred_check
      _
    $region19: #{tpu_custom_call.1} parent=1 // pred_check_branch
      %83 = sbr.rel (0) target = $region21
    $region20: #{tpu_custom_call.1} parent=1 // pred_region
      %85 = vsyncadd [#allocation4], 0
      %s86 = sshll.u32 [#allocation7], 4
      %s87 = int_to_ptr.vmem [resolvable:$true] %s86
      %s88 = sshll.u32 %s2, 4
      %s89 = int_to_ptr.hbm [resolvable:$true] %s88
      %94 = dma.vmem_to_hbm [thread:$0]  %s87, 256, %s89, [#allocation4], 128, 128, 8
    $region21: #{tpu_custom_call.1} parent=1 // pred_fallthru
      _
    // Predicated region
    $region22: #{tpu_custom_call.1} parent=1 // pred_check
      _
    $region23: #{tpu_custom_call.1} parent=1 // pred_check_branch
      %96 = sbr.rel (0) target = $region25
    $region24: #{tpu_custom_call.1} parent=1 // pred_region
      %98 = dma.done [#allocation4], 256
    $region25: #{tpu_custom_call.1} parent=1 // pred_fallthru
      _
    %99 = vsyncpa [#allocation3], 1
    %100 = vsyncpa [#allocation6], 1
    %101 = vsyncpa [#allocation4], 1

</llo_original>
